<compile_context>
chip_gen: v7x
topology: tpu7x:2x2x1
jax: 0.10.0
libtpu: 0.0.40
codegen_flags: <defaults>
</compile_context>

<pallas_src>
import jax
import jax.numpy as jnp
from jax import lax
from jax.experimental import pallas as pl
from jax.experimental.pallas import tpu as pltpu


def attacker_kernel(x_ref, w1_ref, b1_ref, w2t_ref, b2_ref, out_ref):
    """Fused MLP tile, transposed compact output.

    x_ref  : (tb, D)  f32   input tile (cast to MXU dtype in-kernel)
    w1_ref : (D, H)         proj weight (in, out) layout, grid-resident
    b1_ref : (1, H)   f32   proj bias
    w2t_ref: (C, H)         out_proj weight, PyTorch-native (out, in) layout
    b2_ref : (C, 1)   f32   out_proj bias
    out_ref: (C, tb)  f32   transposed logits tile (lane-dense along batch)
    """
    # In-kernel cast of the input tile (trivial VPU work on a (tb, D) tile).
    x = x_ref[...].astype(w1_ref.dtype)

    # First linear layer (MXU) + bias + ReLU in f32.
    h = jnp.dot(x, w1_ref[...], preferred_element_type=jnp.float32)
    h = jnp.maximum(h + b1_ref[...], 0.0)

    # Second linear layer as NT dot_general: (C, H) x (tb, H)^T -> (C, tb).
    h = h.astype(w2t_ref.dtype)
    o = lax.dot_general(
        w2t_ref[...], h,
        dimension_numbers=(((1,), (1,)), ((), ())),
        preferred_element_type=jnp.float32,
    )
    # Ragged last block: rows >= B are garbage but their writes are masked by
    # Pallas (output array is exactly (C, B)).
    out_ref[...] = (o + b2_ref[...]).astype(out_ref.dtype)


def _round_up(a, m):
    return ((a + m - 1) // m) * m


def _choose_tb(B):
    """Batch-tile selection.

    Small batches: one full-extent block.  Large batches: tiles of 256..4096
    rows, multiples of 128 (lane-dense transposed output), with at least 4
    grid steps so both v7x TensorCores get >= 2 pipelined steps each.
    """
    if B <= 256:
        return B
    return max(256, min(4096, _round_up(pl.cdiv(B, 4), 128)))


def attacker_forward(x, w1, b1, w2t, b2, *, tb=None, use_bf16=True):
    """Forward pass of the Attacker MLP.

    x  : (B, D) float32
    w1 : (D, H)        proj weight, stored (in_features, out_features)
    b1 : (H,) or (1,H) proj bias
    w2t: (C, H)        out_proj weight, PyTorch-native (out_features, in_features)
    b2 : (C,) or (C,1) out_proj bias
    Returns (B, C) float32 logits.

    Note: use_bf16=True feeds the MXU with bf16 operands (f32 accumulation);
    this is the only numeric deviation vs. the f32 PyTorch reference.
    """
    B, D = x.shape
    H = w1.shape[1]
    C = w2t.shape[0]

    if tb is None:
        tb = _choose_tb(B)
    tb = min(tb, B)
    grid = (pl.cdiv(B, tb),)

    compute_dtype = jnp.bfloat16 if use_bf16 else jnp.float32
    w1c = w1.astype(compute_dtype)                      # tiny, cast once
    w2tc = w2t.astype(compute_dtype)
    b1c = jnp.reshape(b1, (1, H)).astype(jnp.float32)
    b2c = jnp.reshape(b2, (C, 1)).astype(jnp.float32)

    out_t = pl.pallas_call(
        attacker_kernel,
        out_shape=jax.ShapeDtypeStruct((C, B), jnp.float32),
        grid=grid,
        in_specs=[
            pl.BlockSpec((tb, D), lambda i: (i, 0)),    # x tile (f32, cast in-kernel)
            pl.BlockSpec((D, H), lambda i: (0, 0)),     # W1 (resident)
            pl.BlockSpec((1, H), lambda i: (0, 0)),     # b1
            pl.BlockSpec((C, H), lambda i: (0, 0)),     # W2^T (resident)
            pl.BlockSpec((C, 1), lambda i: (0, 0)),     # b2
        ],
        out_specs=pl.BlockSpec((C, tb), lambda i: (0, i)),  # compact, lane-dense
        compiler_params=pltpu.CompilerParams(
            dimension_semantics=("parallel",),          # batch axis -> megacore
        ),
    )(x, w1c, b1c, w2tc, b2c)

    # Tiny (C, B) -> (B, C) transpose; no padded lanes to slice away.
    return out_t.T


def reference_forward(x, w1, b1, w2t, b2):
    h = jnp.maximum(x @ w1 + jnp.reshape(b1, (1, -1)), 0.0)
    return h @ w2t.T + jnp.reshape(b2, (1, -1))


if __name__ == "__main__":
    # Small shapes consistent with Attacker(repr_dim=32, hiddens=256, n_classes=2)
    batch, repr_dim, hiddens, n_classes = 8, 32, 256, 2

    key = jax.random.PRNGKey(0)
    kx, kw1, kb1, kw2, kb2 = jax.random.split(key, 5)

    x = jax.random.normal(kx, (batch, repr_dim), dtype=jnp.float32)

    # PyTorch-style uniform init. W1 stored (in, out); W2 stored (out, in).
    bound1 = 1.0 / (repr_dim ** 0.5)
    w1 = jax.random.uniform(kw1, (repr_dim, hiddens), jnp.float32, -bound1, bound1)
    b1 = jax.random.uniform(kb1, (hiddens,), jnp.float32, -bound1, bound1)
    bound2 = 1.0 / (hiddens ** 0.5)
    w2t = jax.random.uniform(kw2, (n_classes, hiddens), jnp.float32, -bound2, bound2)
    b2 = jax.random.uniform(kb2, (n_classes,), jnp.float32, -bound2, bound2)

    ref = reference_forward(x, w1, b1, w2t, b2)

    # 1) f32 path: tight match vs reference.
    out_f32 = jax.block_until_ready(
        attacker_forward(x, w1, b1, w2t, b2, use_bf16=False))
    assert out_f32.shape == (batch, n_classes)
    assert jnp.allclose(out_f32, ref, atol=1e-5, rtol=1e-5), \
        "f32 kernel mismatch vs JAX reference"

    # 2) Default (bf16 MXU operands, f32 accumulation): loose tolerance.
    out_bf16 = jax.block_until_ready(attacker_forward(x, w1, b1, w2t, b2))
    assert out_bf16.shape == (batch, n_classes)
    assert jnp.allclose(out_bf16, ref, atol=3e-2, rtol=3e-2), \
        "bf16 kernel mismatch vs JAX reference"

    # 3) Non-multiple-of-8 batch (single ragged block path).
    x_odd = jax.random.normal(kx, (batch + 3, repr_dim), dtype=jnp.float32)
    out_odd = jax.block_until_ready(
        attacker_forward(x_odd, w1, b1, w2t, b2, use_bf16=False))
    ref_odd = reference_forward(x_odd, w1, b1, w2t, b2)
    assert out_odd.shape == (batch + 3, n_classes)
    assert jnp.allclose(out_odd, ref_odd, atol=1e-5, rtol=1e-5), \
        "padded-batch kernel mismatch vs JAX reference"

    # 4) Larger batch: multi-step grid (tb=256, grid=3) with ragged last block.
    x_big = jax.random.normal(kw1, (600, repr_dim), dtype=jnp.float32)
    out_big = jax.block_until_ready(
        attacker_forward(x_big, w1, b1, w2t, b2, use_bf16=False))
    ref_big = reference_forward(x_big, w1, b1, w2t, b2)
    assert out_big.shape == (600, n_classes)
    assert jnp.allclose(out_big, ref_big, atol=1e-5, rtol=1e-5), \
        "multi-block kernel mismatch vs JAX reference"

    print("KERNEL_OK")
</pallas_src>

<mosaic_0001>
module attributes {stable_mosaic.version = 11 : i64} {
  func.func @attacker_kernel(%arg0: i32, %arg1: memref<8x32xf32, #tpu.memory_space<vmem>>, %arg2: memref<32x256xf32, #tpu.memory_space<vmem>>, %arg3: memref<1x256xf32, #tpu.memory_space<vmem>>, %arg4: memref<2x256xf32, #tpu.memory_space<vmem>>, %arg5: memref<2x1xf32, #tpu.memory_space<vmem>>, %arg6: memref<2x8xf32, #tpu.memory_space<vmem>>) attributes {dimension_semantics = [#tpu.dimension_semantics<parallel>], iteration_bounds = array<i64: 1>, scalar_prefetch = 0 : i64, scratch_operands = 0 : i64, tpu.core_type = #tpu.core_type<tc>, window_params = [{transform_indices = @transform_0, window_bounds = array<i64: 8, 32>}, {pipeline_mode = #tpu.pipeline_mode<synchronous>, transform_indices = @transform_1, window_bounds = array<i64: 32, 256>}, {pipeline_mode = #tpu.pipeline_mode<synchronous>, transform_indices = @transform_2, window_bounds = array<i64: 1, 256>}, {pipeline_mode = #tpu.pipeline_mode<synchronous>, transform_indices = @transform_3, window_bounds = array<i64: 2, 256>}, {pipeline_mode = #tpu.pipeline_mode<synchronous>, transform_indices = @transform_4, window_bounds = array<i64: 2, 1>}, {transform_indices = @transform_5, window_bounds = array<i64: 2, 8>}]} {
    %c0 = arith.constant 0 : index
    %c0_0 = arith.constant 0 : index
    %0 = vector.load %arg1[%c0, %c0_0] : memref<8x32xf32, #tpu.memory_space<vmem>>, vector<8x32xf32>
    %c0_1 = arith.constant 0 : index
    %c0_2 = arith.constant 0 : index
    %1 = vector.load %arg2[%c0_1, %c0_2] : memref<32x256xf32, #tpu.memory_space<vmem>>, vector<32x256xf32>
    %cst = arith.constant dense<0.000000e+00> : vector<8x256xf32>
    %2 = tpu.matmul %0, %1, %cst {dimension_numbers = #tpu.dot_dimension_numbers<[1], [0], [0], [1], [0, 0, 1, 1], [], []>} : vector<8x32xf32>, vector<32x256xf32>, vector<8x256xf32> -> vector<8x256xf32>
    %c0_3 = arith.constant 0 : index
    %c0_4 = arith.constant 0 : index
    %3 = vector.load %arg3[%c0_3, %c0_4] : memref<1x256xf32, #tpu.memory_space<vmem>>, vector<1x256xf32>
    %4 = vector.broadcast %3 : vector<1x256xf32> to vector<8x256xf32>
    %5 = arith.addf %2, %4 : vector<8x256xf32>
    %cst_5 = arith.constant 0.000000e+00 : f32
    %6 = vector.broadcast %cst_5 : f32 to vector<8x256xf32>
    %7 = arith.maximumf %5, %6 : vector<8x256xf32>
    %c0_6 = arith.constant 0 : index
    %c0_7 = arith.constant 0 : index
    %8 = vector.load %arg4[%c0_6, %c0_7] : memref<2x256xf32, #tpu.memory_space<vmem>>, vector<2x256xf32>
    %cst_8 = arith.constant dense<0.000000e+00> : vector<2x8xf32>
    %9 = tpu.matmul %8, %7, %cst_8 {dimension_numbers = #tpu.dot_dimension_numbers<[1], [1], [0], [0], [0, 0, 1, 0], [], []>} : vector<2x256xf32>, vector<8x256xf32>, vector<2x8xf32> -> vector<2x8xf32>
    %c0_9 = arith.constant 0 : index
    %c0_10 = arith.constant 0 : index
    %10 = vector.load %arg5[%c0_9, %c0_10] : memref<2x1xf32, #tpu.memory_space<vmem>>, vector<2x1xf32>
    %11 = vector.broadcast %10 : vector<2x1xf32> to vector<2x8xf32>
    %12 = arith.addf %9, %11 : vector<2x8xf32>
    %c0_11 = arith.constant 0 : index
    %c0_12 = arith.constant 0 : index
    %13 = vector.load %arg6[%c0_11, %c0_12] : memref<2x8xf32, #tpu.memory_space<vmem>>, vector<2x8xf32>
    tpu.vector_store %arg6[%c0_11, %c0_12], %12 {strides = array<i32>} : memref<2x8xf32, #tpu.memory_space<vmem>>, vector<2x8xf32>,
    return
  }
  func.func @transform_0(%arg0: i32) -> (i32, i32) {
    %c0_i32 = arith.constant 0 : i32
    %c0_i32_0 = arith.constant 0 : i32
    return %arg0, %c0_i32 : i32, i32
  }
  func.func @transform_1(%arg0: i32) -> (i32, i32) {
    %c0_i32 = arith.constant 0 : i32
    %c0_i32_0 = arith.constant 0 : i32
    %c0_i32_1 = arith.constant 0 : i32
    return %c0_i32, %c0_i32_0 : i32, i32
  }
  func.func @transform_2(%arg0: i32) -> (i32, i32) {
    %c0_i32 = arith.constant 0 : i32
    %c0_i32_0 = arith.constant 0 : i32
    %c0_i32_1 = arith.constant 0 : i32
    return %c0_i32, %c0_i32_0 : i32, i32
  }
  func.func @transform_3(%arg0: i32) -> (i32, i32) {
    %c0_i32 = arith.constant 0 : i32
    %c0_i32_0 = arith.constant 0 : i32
    %c0_i32_1 = arith.constant 0 : i32
    return %c0_i32, %c0_i32_0 : i32, i32
  }
  func.func @transform_4(%arg0: i32) -> (i32, i32) {
    %c0_i32 = arith.constant 0 : i32
    %c0_i32_0 = arith.constant 0 : i32
    %c0_i32_1 = arith.constant 0 : i32
    return %c0_i32, %c0_i32_0 : i32, i32
  }
  func.func @transform_5(%arg0: i32) -> (i32, i32) {
    %c0_i32 = arith.constant 0 : i32
    %c0_i32_0 = arith.constant 0 : i32
    return %c0_i32, %arg0 : i32, i32
  }
}

</mosaic_0001>

<llo_original>
// kernel: tpu_custom_call.1
$region0: #{tpu_custom_call.1}
  #allocation0 [shape = 'u32[]', space=smem, size = 0x4, offset = 0x4, fixed_abs, tag = 'smem constant byte address 0x4 - core index']
  #allocation1 [shape = 'u32[144,128]{1,0:T(1,128)}', space=vmem, size = 0x12000, scoped, tag = 'internal scratch']
  %s0 = inlined_call_operand.hbm [shape: f32[8,32], index: 0, kind: input, shape index: {}]
  %s1 = inlined_call_operand.hbm [shape: f32[32,256], index: 1, kind: input, shape index: {}]
  %s2 = inlined_call_operand.vmem [shape: f32[1,256], index: 2, kind: input, shape index: {}]
  %s3 = inlined_call_operand.vmem [shape: f32[2,256], index: 3, kind: input, shape index: {}]
  %s4 = inlined_call_operand.vmem [shape: f32[2,1], index: 4, kind: input, shape index: {}]
  %s5 = inlined_call_operand.hbm [shape: f32[2,8], index: 5, kind: output, shape index: {}]
  %s6 = sld [smem:[#allocation0]]
  $region38: #{tpu_custom_call.1} parent=0
    _
  %s8 = ssub.s32 1, %s6
  %s9 = scalar_select 0, %s8, %s6
  $region1: #{tpu_custom_call.1} parent=0
    #allocation2 [shape = 'u8[4096]{0}', space=vmem, size = 0x1000, scoped, tag = 'input window, operand 0, single buffered']
    #allocation3 [shape = 's32[1]{0}', space=sflag, size = 0x4, scoped, tag = 'scoped memory for tpu_custom_call.1']
    #allocation4 [shape = 's32[1]{0}', space=sflag, size = 0x4, scoped, tag = 'scoped memory for tpu_custom_call.1']
    #allocation5 [shape = 'u8[32768]{0}', space=vmem, size = 0x8000, scoped, tag = 'input window, operand 1, single buffered']
    #allocation6 [shape = 's32[1]{0}', space=sflag, size = 0x4, scoped, tag = 'scoped memory for tpu_custom_call.1']
    #allocation7 [shape = 'u8[1024]{0}', space=vmem, size = 0x400, scoped, tag = 'output window, operand 0, single buffered']
    %10 = vsyncpa [#allocation3], 0
    %11 = vsyncpa [#allocation6], 0
    %12 = vsyncpa [#allocation4], 0
    // Predicated region
    $region2: #{tpu_custom_call.1} parent=1 // pred_check
      _
    $region3: #{tpu_custom_call.1} parent=1 // pred_check_branch
      %14 = sbr.rel (0) target = $region5
    $region4: #{tpu_custom_call.1} parent=1 // pred_region
      %s16 = ssub.s32 128, 128
      %17 = vsyncadd [#allocation3], %s16
      %s19 = sshll.u32 [#allocation2], 4
      %s20 = int_to_ptr.vmem [resolvable:$true] %s19
      %22 = dma.hbm_to_vmem [thread:$0]  %s0, 128, %s20, [#allocation3]
    $region5: #{tpu_custom_call.1} parent=1 // pred_fallthru
      _
    // Predicated region
    $region6: #{tpu_custom_call.1} parent=1 // pred_check
      _
    $region7: #{tpu_custom_call.1} parent=1 // pred_check_branch
      %24 = sbr.rel (0) target = $region9
    $region8: #{tpu_custom_call.1} parent=1 // pred_region
      %s26 = ssub.s32 1024, 1024
      %27 = vsyncadd [#allocation6], %s26
      %s28 = sshll.u32 [#allocation5], 4
      %s29 = int_to_ptr.vmem [resolvable:$true] %s28
      %34 = dma.hbm_to_vmem [thread:$0]  %s1, 1024, %s29, [#allocation6], 256, 256, 16
    $region9: #{tpu_custom_call.1} parent=1 // pred_fallthru
      _
    // Predicated region
    $region10: #{tpu_custom_call.1} parent=1 // pred_check
      _
    $region11: #{tpu_custom_call.1} parent=1 // pred_check_branch
      %36 = sbr.rel (0) target = $region13
    $region12: #{tpu_custom_call.1} parent=1 // pred_region
      _
    $region13: #{tpu_custom_call.1} parent=1 // pred_fallthru
      _
    // Predicated region
    $region14: #{tpu_custom_call.1} parent=1 // pred_check
      _
    $region15: #{tpu_custom_call.1} parent=1 // pred_check_branch
      %38 = sbr.rel (0) target = $region17
    $region16: #{tpu_custom_call.1} parent=1 // pred_region
      _
    $region17: #{tpu_custom_call.1} parent=1 // pred_fallthru
      _
    // Predicated region
    $region18: #{tpu_custom_call.1} parent=1 // pred_check
      _
    $region19: #{tpu_custom_call.1} parent=1 // pred_check_branch
      %40 = sbr.rel (0) target = $region21
    $region20: #{tpu_custom_call.1} parent=1 // pred_region
      _
    $region21: #{tpu_custom_call.1} parent=1 // pred_fallthru
      _
    // Predicated region
    $region22: #{tpu_custom_call.1} parent=1 // pred_check
      _
    $region23: #{tpu_custom_call.1} parent=1 // pred_check_branch
      %42 = sbr.rel (0) target = $region25
    $region24: #{tpu_custom_call.1} parent=1 // pred_region
      %43 = dma.done [#allocation3], 128
    $region25: #{tpu_custom_call.1} parent=1 // pred_fallthru
      _
    // Predicated region
    $region26: #{tpu_custom_call.1} parent=1 // pred_check
      _
    $region27: #{tpu_custom_call.1} parent=1 // pred_check_branch
      %45 = sbr.rel (0) target = $region29
    $region28: #{tpu_custom_call.1} parent=1 // pred_region
      %46 = dma.done [#allocation6], 1024
    $region29: #{tpu_custom_call.1} parent=1 // pred_fallthru
      _
    %v47 = vld [vmem:[#allocation2] sm:$0xff]
    %v48 = vld [vmem:[#allocation5] sm:$0xff]
    %v49 = vld [vmem:[#allocation5 + $0x8] sm:$0xff]
    %v50 = vld [vmem:[#allocation5 + $0x10] sm:$0xff]
    %v51 = vld [vmem:[#allocation5 + $0x18] sm:$0xff]
    %v52 = vld [vmem:[#allocation5 + $0x20] sm:$0xff]
    %v53 = vld [vmem:[#allocation5 + $0x28] sm:$0xff]
    %v54 = vld [vmem:[#allocation5 + $0x30] sm:$0xff]
    %v55 = vld [vmem:[#allocation5 + $0x38] sm:$0xff]
    %v56 = vld [vmem:[%s2] sm:$0x3]
    %v58 = vlaneseq
    %v59 = vshrl.u32 %v58, 7
    %v60 = vsub.s32 0, %v59
    %v61 = vrot.slane %v56, %v60
    %v62 = vlaneseq
    %v63 = vshrl.u32 %v62, 7
    %v64 = vsub.s32 1, %v63
    %v65 = vrot.slane %v56, %v64
    %vm68 = vcmask 261120
    %v70 = vsel %vm68, %v47, 0
    %72 = vmatprep.subr.mxu0 %v49
    %73 = vmatpush1.msra.mxu0 %v48
    %74 = vmatprep.subr.mxu0 %v51
    %75 = vmatpush1.msra.mxu0 %v50
    %76 = vmatprep.subr.mxu0 %v53
    %77 = vmatpush1.msra.mxu0 %v52
    %78 = vmatprep.subr.mxu0 %v55
    %79 = vmatpush1.msra.mxu0 %v54
    %80 = vmatprep.subr.mxu0 0.0
    %81 = vmatpush1.msra.mxu0 0.0
    %82 = vmatprep.subr.mxu0 0.0
    %83 = vmatpush1.msra.mxu0 0.0
    %84 = vmatprep.subr.mxu0 0.0
    %85 = vmatpush1.msra.mxu0 0.0
    %86 = vmatprep.subr.mxu0 0.0
    %87 = vmatpush1.msra.mxu0 0.0
    %88 = vmatprep.subr.mxu0 0.0
    %89 = vmatpush1.msra.mxu0 0.0
    %90 = vmatprep.subr.mxu0 0.0
    %91 = vmatpush1.msra.mxu0 0.0
    %92 = vmatprep.subr.mxu0 0.0
    %93 = vmatpush1.msra.mxu0 0.0
    %94 = vmatprep.subr.mxu0 0.0
    %95 = vmatpush1.msra.mxu0 0.0
    %96 = vmatprep.subr.mxu0 0.0
    %97 = vmatpush1.msra.mxu0 0.0
    %98 = vmatprep.subr.mxu0 0.0
    %99 = vmatpush1.msra.mxu0 0.0
    %100 = vmatprep.subr.mxu0 0.0
    %101 = vmatpush1.msra.mxu0 0.0
    %102 = vmatprep.subr.mxu0 0.0
    %103 = vmatpush1.msra.mxu0 0.0
    %104 = vmatprep.subr.mxu0 0.0
    %105 = vmatpush1.msra.mxu0 0.0
    %106 = vmatprep.subr.mxu0 0.0
    %107 = vmatpush1.msra.mxu0 0.0
    %108 = vmatprep.subr.mxu0 0.0
    %109 = vmatpush1.msra.mxu0 0.0
    %110 = vmatprep.subr.mxu0 0.0
    %111 = vmatpush1.msra.mxu0 0.0
    %112 = vmatprep.subr.mxu0 0.0
    %113 = vmatpush1.msra.mxu0 0.0
    %114 = vmatprep.subr.mxu0 0.0
    %115 = vmatpush1.msra.mxu0 0.0
    %116 = vmatprep.subr.mxu0 0.0
    %117 = vmatpush1.msra.mxu0 0.0
    %118 = vmatprep.subr.mxu0 0.0
    %119 = vmatpush1.msra.mxu0 0.0
    %120 = vmatprep.subr.mxu0 0.0
    %121 = vmatpush1.msra.mxu0 0.0
    %122 = vmatprep.subr.mxu0 0.0
    %123 = vmatpush1.msra.mxu0 0.0
    %124 = vmatprep.subr.mxu0 0.0
    %125 = vmatpush1.msra.mxu0 0.0
    %126 = vmatprep.subr.mxu0 0.0
    %127 = vmatpush1.msra.mxu0 0.0
    %128 = vmatprep.subr.mxu0 0.0
    %129 = vmatpush1.msra.mxu0 0.0
    %130 = vmatprep.subr.mxu0 0.0
    %131 = vmatpush1.msra.mxu0 0.0
    %132 = vmatprep.subr.mxu0 0.0
    %133 = vmatpush1.msra.mxu0 0.0
    %134 = vmatprep.subr.mxu0 0.0
    %135 = vmatpush1.msra.mxu0 0.0
    %136 = vmatprep.mubr.f32.mxu0 0.0
    %137 = vmatmul.mubr.f32.gmra.mrb[0].mxu0 %v70
    %v138 = vpop.f32.mrb[0].mxu0
    %v139 = vadd.f32 %v61, %v138
    %v140 = vpop.f32.mrb[0].mxu0
    %v141 = vadd.f32 %v65, %v140
    %142 = vdwg.mxu0
    %v143 = vmax.f32 %v139, 0.0
    %v144 = vmax.f32 %v141, 0.0
    %v145 = vld [vmem:[%s3] sm:$0xf]
    %v146 = vld [vmem:[%s4] sm:$0x3]
    %148 = vset.pattern.permute.xlu0 0
    %149 = vperm.xlu0 %148, %v146
    %v150 = vpop.permute.xlu0 %149
    %v154 = vunpack.c.l.s4 1983009808
    %v155 = vunpack.c.0.s8 %v154
    %v156 = vlaneseq
    %v157 = vshrl.u32 %v156, 7
    %v158 = vsub.s32 %v155, %v157
    %v159 = vrot.slane %v145, %v158
    %v160 = vcombine.high %v159, %v159
    %163 = vmatprep.subr.mxu0 %v144
    %164 = vmatpush1.xpose.msra.mxu0 %v143
    %165 = vmatprep.subr.mxu0 0.0
    %166 = vmatpush1.xpose.msra.mxu0 0.0
    %167 = vmatprep.subr.mxu0 0.0
    %168 = vmatpush1.xpose.msra.mxu0 0.0
    %169 = vmatprep.subr.mxu0 0.0
    %170 = vmatpush1.xpose.msra.mxu0 0.0
    %171 = vmatprep.subr.mxu0 0.0
    %172 = vmatpush1.xpose.msra.mxu0 0.0
    %173 = vmatprep.subr.mxu0 0.0
    %174 = vmatpush1.xpose.msra.mxu0 0.0
    %175 = vmatprep.subr.mxu0 0.0
    %176 = vmatpush1.xpose.msra.mxu0 0.0
    %177 = vmatprep.subr.mxu0 0.0
    %178 = vmatpush1.xpose.msra.mxu0 0.0
    %179 = vmatprep.subr.mxu0 0.0
    %180 = vmatpush1.xpose.msra.mxu0 0.0
    %181 = vmatprep.subr.mxu0 0.0
    %182 = vmatpush1.xpose.msra.mxu0 0.0
    %183 = vmatprep.subr.mxu0 0.0
    %184 = vmatpush1.xpose.msra.mxu0 0.0
    %185 = vmatprep.subr.mxu0 0.0
    %186 = vmatpush1.xpose.msra.mxu0 0.0
    %187 = vmatprep.subr.mxu0 0.0
    %188 = vmatpush1.xpose.msra.mxu0 0.0
    %189 = vmatprep.subr.mxu0 0.0
    %190 = vmatpush1.xpose.msra.mxu0 0.0
    %191 = vmatprep.subr.mxu0 0.0
    %192 = vmatpush1.xpose.msra.mxu0 0.0
    %193 = vmatprep.subr.mxu0 0.0
    %194 = vmatpush1.xpose.msra.mxu0 0.0
    %195 = vmatprep.subr.mxu0 0.0
    %196 = vmatpush1.xpose.msra.mxu0 0.0
    %197 = vmatprep.subr.mxu0 0.0
    %198 = vmatpush1.xpose.msra.mxu0 0.0
    %199 = vmatprep.subr.mxu0 0.0
    %200 = vmatpush1.xpose.msra.mxu0 0.0
    %201 = vmatprep.subr.mxu0 0.0
    %202 = vmatpush1.xpose.msra.mxu0 0.0
    %203 = vmatprep.subr.mxu0 0.0
    %204 = vmatpush1.xpose.msra.mxu0 0.0
    %205 = vmatprep.subr.mxu0 0.0
    %206 = vmatpush1.xpose.msra.mxu0 0.0
    %207 = vmatprep.subr.mxu0 0.0
    %208 = vmatpush1.xpose.msra.mxu0 0.0
    %209 = vmatprep.subr.mxu0 0.0
    %210 = vmatpush1.xpose.msra.mxu0 0.0
    %211 = vmatprep.subr.mxu0 0.0
    %212 = vmatpush1.xpose.msra.mxu0 0.0
    %213 = vmatprep.subr.mxu0 0.0
    %214 = vmatpush1.xpose.msra.mxu0 0.0
    %215 = vmatprep.subr.mxu0 0.0
    %216 = vmatpush1.xpose.msra.mxu0 0.0
    %217 = vmatprep.subr.mxu0 0.0
    %218 = vmatpush1.xpose.msra.mxu0 0.0
    %219 = vmatprep.subr.mxu0 0.0
    %220 = vmatpush1.xpose.msra.mxu0 0.0
    %221 = vmatprep.subr.mxu0 0.0
    %222 = vmatpush1.xpose.msra.mxu0 0.0
    %223 = vmatprep.subr.mxu0 0.0
    %224 = vmatpush1.xpose.msra.mxu0 0.0
    %225 = vmatprep.subr.mxu0 0.0
    %226 = vmatpush1.xpose.msra.mxu0 0.0
    %227 = vmatprep.mubr.f32.mxu0 %v160
    %228 = vmatmul.mubr.f32.gmra.mrb[0].mxu0 %v159
    %v229 = vpop.f32.mrb[0].mxu0
    %v230 = vadd.f32 %v150, %v229
    %v231 = vpop.f32.mrb[0].mxu0
    %232 = vdwg.mxu0
    %vm233 = vcmask 58368
    %234 = vst.msk [vmem:[#allocation7] sm:$0x3] %vm233, %v230
    // Predicated region
    $region30: #{tpu_custom_call.1} parent=1 // pred_check
      _
    $region31: #{tpu_custom_call.1} parent=1 // pred_check_branch
      %236 = sbr.rel (0) target = $region33
    $region32: #{tpu_custom_call.1} parent=1 // pred_region
      %s238 = ssub.s32 32, 32
      %239 = vsyncadd [#allocation4], %s238
      %s241 = sshll.u32 [#allocation7], 4
      %s242 = int_to_ptr.vmem [resolvable:$true] %s241
      %244 = dma.vmem_to_hbm [thread:$0]  %s242, 32, %s5, [#allocation4]
    $region33: #{tpu_custom_call.1} parent=1 // pred_fallthru
      _
    // Predicated region
    $region34: #{tpu_custom_call.1} parent=1 // pred_check
      _
    $region35: #{tpu_custom_call.1} parent=1 // pred_check_branch
      %246 = sbr.rel (0) target = $region37
    $region36: #{tpu_custom_call.1} parent=1 // pred_region
      %247 = dma.done [#allocation4], 32
    $region37: #{tpu_custom_call.1} parent=1 // pred_fallthru
      _
    %248 = vsyncpa [#allocation3], 1
    %249 = vsyncpa [#allocation6], 1
    %250 = vsyncpa [#allocation4], 1

</llo_original>
